<compile_context>
chip_gen: v7x
topology: tpu7x:2x2x1
jax: 0.10.0
libtpu: 0.0.40
codegen_flags: <defaults>
</compile_context>

<pallas_src>
import math

import jax
import jax.numpy as jnp
from jax.experimental import pallas as pl
from jax.experimental.pallas import tpu as pltpu

LANE = 128


def _round_up(a, b):
    return (a + b - 1) // b * b


def _convmlp_kernel(x_ref, w1_ref, b1_ref, w2_ref, b2_ref, o_ref):
    # x_ref : (BN*Cin,  TILE_L)   tokens on lanes, (image,channel) on sublanes
    # w1_ref: (BN*Chid, BN*Cin)   block-diagonal kron(I_BN, W1^T)
    # b1_ref: (BN*Chid, 1)
    # w2_ref: (BN*Cout, BN*Chid)  block-diagonal kron(I_BN, W2^T)
    # b2_ref: (BN*Cout, 1)
    # o_ref : (BN*Cout, TILE_L)
    h = jnp.dot(w1_ref[...], x_ref[...], preferred_element_type=jnp.float32)
    h = jnp.maximum(h + b1_ref[...], 0.0)                 # fc1 bias + ReLU
    o = jnp.dot(w2_ref[...], h, preferred_element_type=jnp.float32)
    o_ref[...] = (o + b2_ref[...]).astype(o_ref.dtype)    # fc2 bias


def _default_vmem_limit():
    # Per-generation cap: ~half the physical VMEM (v7x: 64 MiB -> 32 MiB,
    # v5e/v6e: 128 MiB -> 64 MiB), conservative fallback if query fails.
    try:
        cap = int(getattr(pltpu.get_tpu_info(), "vmem_capacity_bytes", 0))
        if cap > 0:
            return min(cap // 2, 100 * 1024 * 1024)
    except Exception:
        pass
    return 32 * 1024 * 1024


def conv_mlp_pallas(x_nchw, w1, b1, w2, b2, *,
                    max_tokens_per_tile=32768,
                    target_step_bytes=2 * 1024 * 1024,
                    max_bd_weight_bytes=2 * 1024 * 1024,
                    vmem_limit_bytes=None):
    """ConvMlp forward.

    x_nchw: (N, Cin, H, W)
    w1: (Cin, Chid), b1: (Chid,)   -- fc1 (torch weight (Chid,Cin,1,1), transposed)
    w2: (Chid, Cout), b2: (Cout,)  -- fc2
    returns (N, Cout, H, W)
    """
    N, Cin, H, W = x_nchw.shape
    Chid = w1.shape[1]
    Cout = w2.shape[1]
    HW = H * W
    itemsize = jnp.dtype(x_nchw.dtype).itemsize
    w_itemsize = jnp.dtype(w1.dtype).itemsize
    sub = max(8, 32 // itemsize)          # sublane multiple (f32: 8, bf16: 16)

    if vmem_limit_bytes is None:
        vmem_limit_bytes = _default_vmem_limit()

    # ---------------- sizing helpers (all dtype / layout aware) -----------
    def bd_weight_bytes(bn):
        return (bn * bn * (Chid * Cin + Cout * Chid)
                + bn * (Chid + Cout)) * w_itemsize

    def hbm_step_bytes(bn, tile_l):
        return bn * (Cin + Cout) * tile_l * itemsize

    def size_tile(bn):
        budget = int(vmem_limit_bytes * 0.8) - 2 * bd_weight_bytes(bn)
        rows_in = _round_up(bn * Cin, sub)
        rows_out = _round_up(bn * Cout, sub)
        rows_hid = _round_up(bn * Chid, 8)      # f32 intermediate
        per_tok = (2 * rows_in + 2 * rows_out) * itemsize + 2 * rows_hid * 4
        t = budget // max(per_tok, 1)
        t = min(t, max_tokens_per_tile, hw_lane)
        t = max(LANE, (t // LANE) * LANE)
        return min(t, hw_lane)

    hw_lane = _round_up(HW, LANE)

    # ---- batch block BN: make BN*Cin / BN*Cout sublane multiples ----------
    a1 = sub // math.gcd(Cin, sub)
    a2 = sub // math.gcd(Cout, sub)
    align = a1 * a2 // math.gcd(a1, a2)
    bn = N if align >= N else align
    tile_l = size_tile(bn)

    # Grow BN when the token dim is already maxed out (small feature maps) so
    # each grid step still moves enough HBM bytes to hide per-step overhead.
    while (bn < N
           and tile_l == hw_lane
           and hbm_step_bytes(bn, tile_l) < target_step_bytes):
        cand = min(bn * 2, N)
        if cand != N and cand % align != 0:
            break
        if bd_weight_bytes(cand) > max_bd_weight_bytes:
            break
        cand_tile = size_tile(cand)
        if cand_tile < tile_l:                  # would shrink token tile: stop
            break
        bn, tile_l = cand, cand_tile

    grid_b = pl.cdiv(N, bn)
    grid_l = pl.cdiv(HW, tile_l)

    # Give v7x's two TensorCores something to split only when each half still
    # carries substantial bytes (a forced split is pure overhead on v5e/v6e).
    if grid_b * grid_l == 1 and hw_lane >= 2 * LANE:
        half = max(LANE, ((hw_lane // 2) // LANE) * LANE)
        if hbm_step_bytes(bn, half) >= 512 * 1024:
            tile_l = half
            grid_l = pl.cdiv(HW, tile_l)

    # ---- weights: block-diagonal expansion over the batch block -----------
    w1t = jnp.transpose(w1)                    # (Chid, Cin)
    w2t = jnp.transpose(w2)                    # (Cout, Chid)
    if bn > 1:
        eye1 = jnp.eye(bn, dtype=w1t.dtype)
        eye2 = jnp.eye(bn, dtype=w2t.dtype)
        w1k = jnp.kron(eye1, w1t)              # (bn*Chid, bn*Cin)
        w2k = jnp.kron(eye2, w2t)              # (bn*Cout, bn*Chid)
        b1k = jnp.tile(b1, bn).reshape(bn * Chid, 1)
        b2k = jnp.tile(b2, bn).reshape(bn * Cout, 1)
    else:
        w1k, w2k = w1t, w2t
        b1k = b1.reshape(Chid, 1)
        b2k = b2.reshape(Cout, 1)

    Rin, Rhid, Rout = bn * Cin, bn * Chid, bn * Cout

    # (N, Cin, H, W) -> (N*Cin, H*W): channels-on-sublanes, tokens-on-lanes.
    x2 = x_nchw.reshape(N * Cin, HW)

    flops = 2 * N * HW * (Cin * Chid + Chid * Cout)
    bytes_accessed = (N * (Cin + Cout) * HW * itemsize
                      + (Chid * Cin + Cout * Chid + Chid + Cout) * w_itemsize)
    cost = pl.CostEstimate(flops=int(flops), transcendentals=0,
                           bytes_accessed=int(bytes_accessed))

    out2 = pl.pallas_call(
        _convmlp_kernel,
        out_shape=jax.ShapeDtypeStruct((N * Cout, HW), x_nchw.dtype),
        grid_spec=pltpu.PrefetchScalarGridSpec(
            num_scalar_prefetch=0,
            grid=(grid_b, grid_l),
            in_specs=[
                # Activations: per (batch-block, token-tile) slab; boundary
                # blocks are masked by Pallas (no wrapper pad / slice).
                pl.BlockSpec((Rin, tile_l), lambda b, l: (b, l)),
                # Constant-index operands stay resident in VMEM across steps.
                pl.BlockSpec((Rhid, Rin), lambda b, l: (0, 0)),
                pl.BlockSpec((Rhid, 1), lambda b, l: (0, 0)),
                pl.BlockSpec((Rout, Rhid), lambda b, l: (0, 0)),
                pl.BlockSpec((Rout, 1), lambda b, l: (0, 0)),
            ],
            out_specs=pl.BlockSpec((Rout, tile_l), lambda b, l: (b, l)),
        ),
        compiler_params=pltpu.CompilerParams(
            dimension_semantics=("parallel", "parallel"),
            vmem_limit_bytes=int(vmem_limit_bytes)),
        cost_estimate=cost,
    )(x2, w1k, b1k, w2k, b2k)

    # (N*Cout, H*W) -> NCHW (pure logical reshape, no transpose).
    return out2.reshape(N, Cout, H, W)


if __name__ == "__main__":
    key = jax.random.PRNGKey(0)
    k_x, k_w1, k_b1, k_w2, k_b2 = jax.random.split(key, 5)

    # ConvMlp(in_features=4, hidden_features=32, out_features=4)
    N, Cin, H, W = 2, 4, 16, 16
    Chid, Cout = 32, 4

    x = jax.random.normal(k_x, (N, Cin, H, W), dtype=jnp.float32)
    # fc1.weight: (Chid, Cin, 1, 1) in torch -> stored here as (Cin, Chid)
    w1 = jax.random.normal(k_w1, (Cin, Chid), dtype=jnp.float32) * 0.1
    b1 = jax.random.normal(k_b1, (Chid,), dtype=jnp.float32) * 0.1
    # fc2.weight: (Cout, Chid, 1, 1) in torch -> stored here as (Chid, Cout)
    w2 = jax.random.normal(k_w2, (Chid, Cout), dtype=jnp.float32) * 0.1
    b2 = jax.random.normal(k_b2, (Cout,), dtype=jnp.float32) * 0.1

    fwd = jax.jit(conv_mlp_pallas)
    out = jax.block_until_ready(fwd(x, w1, b1, w2, b2))

    # Pure-JAX reference of the PyTorch forward (1x1 convs over NCHW;
    # norm_layer=None and drop=0.0 are identities).
    h_ref = jnp.einsum("nchw,cd->ndhw", x, w1) + b1[None, :, None, None]
    h_ref = jnp.maximum(h_ref, 0.0)
    ref = jnp.einsum("ndhw,do->nohw", h_ref, w2) + b2[None, :, None, None]

    assert out.shape == (N, Cout, H, W), out.shape
    assert jnp.allclose(out, ref, atol=1e-4, rtol=1e-4), float(
        jnp.max(jnp.abs(out - ref)))

    print("KERNEL_OK")
</pallas_src>

<mosaic_0001>
module attributes {stable_mosaic.version = 11 : i64} {
  func.func @_convmlp_kernel(%arg0: i32, %arg1: i32, %arg2: memref<8x256xf32, #tpu.memory_space<vmem>>, %arg3: memref<64x8xf32, #tpu.memory_space<vmem>>, %arg4: memref<64x1xf32, #tpu.memory_space<vmem>>, %arg5: memref<8x64xf32, #tpu.memory_space<vmem>>, %arg6: memref<8x1xf32, #tpu.memory_space<vmem>>, %arg7: memref<8x256xf32, #tpu.memory_space<vmem>>) attributes {dimension_semantics = [#tpu.dimension_semantics<parallel>, #tpu.dimension_semantics<parallel>], iteration_bounds = array<i64: 1, 1>, scalar_prefetch = 0 : i64, scratch_operands = 0 : i64, tpu.core_type = #tpu.core_type<tc>, window_params = [{transform_indices = @transform_0, window_bounds = array<i64: 8, 256>}, {pipeline_mode = #tpu.pipeline_mode<synchronous>, transform_indices = @transform_1, window_bounds = array<i64: 64, 8>}, {pipeline_mode = #tpu.pipeline_mode<synchronous>, transform_indices = @transform_2, window_bounds = array<i64: 64, 1>}, {pipeline_mode = #tpu.pipeline_mode<synchronous>, transform_indices = @transform_3, window_bounds = array<i64: 8, 64>}, {pipeline_mode = #tpu.pipeline_mode<synchronous>, transform_indices = @transform_4, window_bounds = array<i64: 8, 1>}, {transform_indices = @transform_5, window_bounds = array<i64: 8, 256>}]} {
    %c0 = arith.constant 0 : index
    %c0_0 = arith.constant 0 : index
    %0 = vector.load %arg3[%c0, %c0_0] : memref<64x8xf32, #tpu.memory_space<vmem>>, vector<64x8xf32>
    %c0_1 = arith.constant 0 : index
    %c0_2 = arith.constant 0 : index
    %1 = vector.load %arg2[%c0_1, %c0_2] : memref<8x256xf32, #tpu.memory_space<vmem>>, vector<8x256xf32>
    %cst = arith.constant dense<0.000000e+00> : vector<64x256xf32>
    %2 = tpu.matmul %0, %1, %cst {dimension_numbers = #tpu.dot_dimension_numbers<[1], [0], [0], [1], [0, 0, 1, 1], [], []>} : vector<64x8xf32>, vector<8x256xf32>, vector<64x256xf32> -> vector<64x256xf32>
    %c0_3 = arith.constant 0 : index
    %c0_4 = arith.constant 0 : index
    %3 = vector.load %arg4[%c0_3, %c0_4] : memref<64x1xf32, #tpu.memory_space<vmem>>, vector<64x1xf32>
    %4 = vector.broadcast %3 : vector<64x1xf32> to vector<64x256xf32>
    %5 = arith.addf %2, %4 : vector<64x256xf32>
    %cst_5 = arith.constant 0.000000e+00 : f32
    %6 = vector.broadcast %cst_5 : f32 to vector<64x256xf32>
    %7 = arith.maximumf %5, %6 : vector<64x256xf32>
    %c0_6 = arith.constant 0 : index
    %c0_7 = arith.constant 0 : index
    %8 = vector.load %arg5[%c0_6, %c0_7] : memref<8x64xf32, #tpu.memory_space<vmem>>, vector<8x64xf32>
    %cst_8 = arith.constant dense<0.000000e+00> : vector<8x256xf32>
    %9 = tpu.matmul %8, %7, %cst_8 {dimension_numbers = #tpu.dot_dimension_numbers<[1], [0], [0], [1], [0, 0, 1, 1], [], []>} : vector<8x64xf32>, vector<64x256xf32>, vector<8x256xf32> -> vector<8x256xf32>
    %c0_9 = arith.constant 0 : index
    %c0_10 = arith.constant 0 : index
    %10 = vector.load %arg6[%c0_9, %c0_10] : memref<8x1xf32, #tpu.memory_space<vmem>>, vector<8x1xf32>
    %11 = vector.broadcast %10 : vector<8x1xf32> to vector<8x256xf32>
    %12 = arith.addf %9, %11 : vector<8x256xf32>
    %c0_11 = arith.constant 0 : index
    %c0_12 = arith.constant 0 : index
    %13 = vector.load %arg7[%c0_11, %c0_12] : memref<8x256xf32, #tpu.memory_space<vmem>>, vector<8x256xf32>
    tpu.vector_store %arg7[%c0_11, %c0_12], %12 {strides = array<i32>} : memref<8x256xf32, #tpu.memory_space<vmem>>, vector<8x256xf32>,
    return
  }
  func.func @transform_0(%arg0: i32, %arg1: i32) -> (i32, i32) {
    %c0_i32 = arith.constant 0 : i32
    return %arg0, %arg1 : i32, i32
  }
  func.func @transform_1(%arg0: i32, %arg1: i32) -> (i32, i32) {
    %c0_i32 = arith.constant 0 : i32
    %c0_i32_0 = arith.constant 0 : i32
    %c0_i32_1 = arith.constant 0 : i32
    return %c0_i32, %c0_i32_0 : i32, i32
  }
  func.func @transform_2(%arg0: i32, %arg1: i32) -> (i32, i32) {
    %c0_i32 = arith.constant 0 : i32
    %c0_i32_0 = arith.constant 0 : i32
    %c0_i32_1 = arith.constant 0 : i32
    return %c0_i32, %c0_i32_0 : i32, i32
  }
  func.func @transform_3(%arg0: i32, %arg1: i32) -> (i32, i32) {
    %c0_i32 = arith.constant 0 : i32
    %c0_i32_0 = arith.constant 0 : i32
    %c0_i32_1 = arith.constant 0 : i32
    return %c0_i32, %c0_i32_0 : i32, i32
  }
  func.func @transform_4(%arg0: i32, %arg1: i32) -> (i32, i32) {
    %c0_i32 = arith.constant 0 : i32
    %c0_i32_0 = arith.constant 0 : i32
    %c0_i32_1 = arith.constant 0 : i32
    return %c0_i32, %c0_i32_0 : i32, i32
  }
  func.func @transform_5(%arg0: i32, %arg1: i32) -> (i32, i32) {
    %c0_i32 = arith.constant 0 : i32
    return %arg0, %arg1 : i32, i32
  }
}

</mosaic_0001>

<llo_original>
// kernel: tile.18
$region0: #{tile.18}
  #allocation0 [shape = 's32[1]{0}', space=sflag, size = 0x4, scoped, tag = 'scoped memory for tile.18']
  %s0 = inlined_call_operand.vmem [shape: f32[4], index: 0, kind: input, shape index: {}]
  %s1 = inlined_call_operand.vmem [shape: f32[2,4], index: 1, kind: output, shape index: {}]
  // Predicated region
  $region2: #{tile.18} parent=0 // pred_check
    _
  $region3: #{tile.18} parent=0 // pred_check_branch
    %3 = sbr.rel (0) target = $region5
  $region4: #{tile.18} parent=0 // pred_region
    _
  $region5: #{tile.18} parent=0 // pred_fallthru
    _
  %v4 = vld [vmem:[%s0] ss:$0 sm:$0xff]
  %5 = vst [vmem:[%s1] sm:$0x3] %v4

// kernel: tile.13
$region0: #{tile.13}
  #allocation0 [shape = 's32[1]{0}', space=sflag, size = 0x4, scoped, tag = 'scoped memory for tile.13']
  %s0 = inlined_call_operand.vmem [shape: f32[32], index: 0, kind: input, shape index: {}]
  %s1 = inlined_call_operand.vmem [shape: f32[2,32], index: 1, kind: output, shape index: {}]
  // Predicated region
  $region2: #{tile.13} parent=0 // pred_check
    _
  $region3: #{tile.13} parent=0 // pred_check_branch
    %3 = sbr.rel (0) target = $region5
  $region4: #{tile.13} parent=0 // pred_region
    _
  $region5: #{tile.13} parent=0 // pred_fallthru
    _
  %v4 = vld [vmem:[%s0] ss:$0 sm:$0xff]
  %5 = vst [vmem:[%s1] sm:$0x3] %v4

// kernel: tile.1
$region0: #{tile.1}
  %s0 = inlined_call_operand.vmem [shape: f32[2,4], index: 0, kind: input, shape index: {}]
  %s1 = inlined_call_operand.vmem [shape: f32[8,1], index: 1, kind: output, shape index: {}]
  $region1: #{tile.1} parent=0
    #allocation0 [shape = 'u8[4096]{0}', space=vmem, size = 0x1000, scoped, tag = 'scoped mem for input reshape']
    %s3 = sshllo.u32 0, 2
    %v4 = vld [vmem:[%s0] sm:%s3]
    %5 = vst [vmem:[#allocation0] sm:%s3] %v4
    %v6 = vld [vmem:[#allocation0] sm:$0x3]
    %vm7 = vcmask 7168
    %8 = vst.msk [vmem:[%s1] ss:$4 sm:$0x3] %vm7, %v6
    %v9 = vld [vmem:[#allocation0] sm:$0x3]
    %10 = vrot.lane.b32.xlu0 %v9, 127
    %v11 = vpop.permute.xlu0 %10
    %vm12 = vcmask 7168
    %s13 = scalar_lea.vmem %s1, 1
    %14 = vst.msk [vmem:[%s13] ss:$4 sm:$0x3] %vm12, %v11
    %v15 = vld [vmem:[#allocation0] sm:$0x3]
    %16 = vrot.lane.b32.xlu0 %v15, 126
    %v17 = vpop.permute.xlu0 %16
    %vm18 = vcmask 7168
    %s19 = scalar_lea.vmem %s1, 2
    %20 = vst.msk [vmem:[%s19] ss:$4 sm:$0x3] %vm18, %v17
    %v21 = vld [vmem:[#allocation0] sm:$0x3]
    %22 = vrot.lane.b32.xlu0 %v21, 125
    %v23 = vpop.permute.xlu0 %22
    %vm24 = vcmask 7168
    %s25 = scalar_lea.vmem %s1, 3
    %26 = vst.msk [vmem:[%s25] ss:$4 sm:$0x3] %vm24, %v23

// kernel: tile.0
$region0: #{tile.0}
  %s0 = inlined_call_operand.vmem [shape: f32[2,32], index: 0, kind: input, shape index: {}]
  %s1 = inlined_call_operand.vmem [shape: f32[64,1], index: 1, kind: output, shape index: {}]
  $region1: #{tile.0} parent=0
    #allocation0 [shape = 'u8[4096]{0}', space=vmem, size = 0x1000, scoped, tag = 'scoped mem for input reshape']
    %s3 = sshllo.u32 0, 2
    %v4 = vld [vmem:[%s0] sm:%s3]
    %5 = vst [vmem:[#allocation0] sm:%s3] %v4
    %v6 = vld [vmem:[#allocation0] sm:$0x3]
    %vm7 = vcmask 7168
    %8 = vst.msk [vmem:[%s1] sm:$0x1] %vm7, %v6
    %s9 = scalar_lea.vmem %s1, 31
    %10 = vst.msk [vmem:[%s9] sm:$0x2] %vm7, %v6
    %v11 = vld [vmem:[#allocation0] sm:$0x3]
    %12 = vrot.lane.b32.xlu0 %v11, 127
    %v13 = vpop.permute.xlu0 %12
    %vm14 = vcmask 7168
    %s15 = scalar_lea.vmem %s1, 1
    %16 = vst.msk [vmem:[%s15] sm:$0x1] %vm14, %v13
    %s17 = scalar_lea.vmem %s1, 32
    %18 = vst.msk [vmem:[%s17] sm:$0x2] %vm14, %v13
    %v19 = vld [vmem:[#allocation0] sm:$0x3]
    %20 = vrot.lane.b32.xlu0 %v19, 126
    %v21 = vpop.permute.xlu0 %20
    %vm22 = vcmask 7168
    %s23 = scalar_lea.vmem %s1, 2
    %24 = vst.msk [vmem:[%s23] sm:$0x1] %vm22, %v21
    %s25 = scalar_lea.vmem %s1, 33
    %26 = vst.msk [vmem:[%s25] sm:$0x2] %vm22, %v21
    %v27 = vld [vmem:[#allocation0] sm:$0x3]
    %28 = vrot.lane.b32.xlu0 %v27, 125
    %v29 = vpop.permute.xlu0 %28
    %vm30 = vcmask 7168
    %s31 = scalar_lea.vmem %s1, 3
    %32 = vst.msk [vmem:[%s31] sm:$0x1] %vm30, %v29
    %s33 = scalar_lea.vmem %s1, 34
    %34 = vst.msk [vmem:[%s33] sm:$0x2] %vm30, %v29
    %v35 = vld [vmem:[#allocation0] sm:$0x3]
    %36 = vrot.lane.b32.xlu0 %v35, 124
    %v37 = vpop.permute.xlu0 %36
    %vm38 = vcmask 7168
    %s39 = scalar_lea.vmem %s1, 4
    %40 = vst.msk [vmem:[%s39] sm:$0x1] %vm38, %v37
    %s41 = scalar_lea.vmem %s1, 35
    %42 = vst.msk [vmem:[%s41] sm:$0x2] %vm38, %v37
    %v43 = vld [vmem:[#allocation0] sm:$0x3]
    %44 = vrot.lane.b32.xlu0 %v43, 123
    %v45 = vpop.permute.xlu0 %44
    %vm46 = vcmask 7168
    %s47 = scalar_lea.vmem %s1, 5
    %48 = vst.msk [vmem:[%s47] sm:$0x1] %vm46, %v45
    %s49 = scalar_lea.vmem %s1, 36
    %50 = vst.msk [vmem:[%s49] sm:$0x2] %vm46, %v45
    %v51 = vld [vmem:[#allocation0] sm:$0x3]
    %52 = vrot.lane.b32.xlu0 %v51, 122
    %v53 = vpop.permute.xlu0 %52
    %vm54 = vcmask 7168
    %s55 = scalar_lea.vmem %s1, 6
    %56 = vst.msk [vmem:[%s55] sm:$0x1] %vm54, %v53
    %s57 = scalar_lea.vmem %s1, 37
    %58 = vst.msk [vmem:[%s57] sm:$0x2] %vm54, %v53
    %v59 = vld [vmem:[#allocation0] sm:$0x3]
    %60 = vrot.lane.b32.xlu0 %v59, 121
    %v61 = vpop.permute.xlu0 %60
    %vm62 = vcmask 7168
    %s63 = scalar_lea.vmem %s1, 7
    %64 = vst.msk [vmem:[%s63] sm:$0x1] %vm62, %v61
    %s65 = scalar_lea.vmem %s1, 38
    %66 = vst.msk [vmem:[%s65] sm:$0x2] %vm62, %v61
    %v67 = vld [vmem:[#allocation0] sm:$0x3]
    %68 = vrot.lane.b32.xlu0 %v67, 120
    %v69 = vpop.permute.xlu0 %68
    %vm70 = vcmask 7168
    %s71 = scalar_lea.vmem %s1, 8
    %72 = vst.msk [vmem:[%s71] sm:$0x1] %vm70, %v69
    %s73 = scalar_lea.vmem %s1, 39
    %74 = vst.msk [vmem:[%s73] sm:$0x2] %vm70, %v69
    %v75 = vld [vmem:[#allocation0] sm:$0x3]
    %76 = vrot.lane.b32.xlu0 %v75, 119
    %v77 = vpop.permute.xlu0 %76
    %vm78 = vcmask 7168
    %s79 = scalar_lea.vmem %s1, 9
    %80 = vst.msk [vmem:[%s79] sm:$0x1] %vm78, %v77
    %s81 = scalar_lea.vmem %s1, 40
    %82 = vst.msk [vmem:[%s81] sm:$0x2] %vm78, %v77
    %v83 = vld [vmem:[#allocation0] sm:$0x3]
    %84 = vrot.lane.b32.xlu0 %v83, 118
    %v85 = vpop.permute.xlu0 %84
    %vm86 = vcmask 7168
    %s87 = scalar_lea.vmem %s1, 10
    %88 = vst.msk [vmem:[%s87] sm:$0x1] %vm86, %v85
    %s89 = scalar_lea.vmem %s1, 41
    %90 = vst.msk [vmem:[%s89] sm:$0x2] %vm86, %v85
    %v91 = vld [vmem:[#allocation0] sm:$0x3]
    %92 = vrot.lane.b32.xlu0 %v91, 117
    %v93 = vpop.permute.xlu0 %92
    %vm94 = vcmask 7168
    %s95 = scalar_lea.vmem %s1, 11
    %96 = vst.msk [vmem:[%s95] sm:$0x1] %vm94, %v93
    %s97 = scalar_lea.vmem %s1, 42
    %98 = vst.msk [vmem:[%s97] sm:$0x2] %vm94, %v93
    %v99 = vld [vmem:[#allocation0] sm:$0x3]
    %100 = vrot.lane.b32.xlu0 %v99, 116
    %v101 = vpop.permute.xlu0 %100
    %vm102 = vcmask 7168
    %s103 = scalar_lea.vmem %s1, 12
    %104 = vst.msk [vmem:[%s103] sm:$0x1] %vm102, %v101
    %s105 = scalar_lea.vmem %s1, 43
    %106 = vst.msk [vmem:[%s105] sm:$0x2] %vm102, %v101
    %v107 = vld [vmem:[#allocation0] sm:$0x3]
    %108 = vrot.lane.b32.xlu0 %v107, 115
    %v109 = vpop.permute.xlu0 %108
    %vm110 = vcmask 7168
    %s111 = scalar_lea.vmem %s1, 13
    %112 = vst.msk [vmem:[%s111] sm:$0x1] %vm110, %v109
    %s113 = scalar_lea.vmem %s1, 44
    %114 = vst.msk [vmem:[%s113] sm:$0x2] %vm110, %v109
    %v115 = vld [vmem:[#allocation0] sm:$0x3]
    %116 = vrot.lane.b32.xlu0 %v115, 114
    %v117 = vpop.permute.xlu0 %116
    %vm118 = vcmask 7168
    %s119 = scalar_lea.vmem %s1, 14
    %120 = vst.msk [vmem:[%s119] sm:$0x1] %vm118, %v117
    %s121 = scalar_lea.vmem %s1, 45
    %122 = vst.msk [vmem:[%s121] sm:$0x2] %vm118, %v117
    %v123 = vld [vmem:[#allocation0] sm:$0x3]
    %124 = vrot.lane.b32.xlu0 %v123, 113
    %v125 = vpop.permute.xlu0 %124
    %vm126 = vcmask 7168
    %s127 = scalar_lea.vmem %s1, 15
    %128 = vst.msk [vmem:[%s127] sm:$0x1] %vm126, %v125
    %s129 = scalar_lea.vmem %s1, 46
    %130 = vst.msk [vmem:[%s129] sm:$0x2] %vm126, %v125
    %v131 = vld [vmem:[#allocation0] sm:$0x3]
    %132 = vrot.lane.b32.xlu0 %v131, 112
    %v133 = vpop.permute.xlu0 %132
    %vm134 = vcmask 7168
    %s135 = scalar_lea.vmem %s1, 16
    %136 = vst.msk [vmem:[%s135] sm:$0x1] %vm134, %v133
    %s137 = scalar_lea.vmem %s1, 47
    %138 = vst.msk [vmem:[%s137] sm:$0x2] %vm134, %v133
    %v139 = vld [vmem:[#allocation0] sm:$0x3]
    %140 = vrot.lane.b32.xlu0 %v139, 111
    %v141 = vpop.permute.xlu0 %140
    %vm142 = vcmask 7168
    %s143 = scalar_lea.vmem %s1, 17
    %144 = vst.msk [vmem:[%s143] sm:$0x1] %vm142, %v141
    %s145 = scalar_lea.vmem %s1, 48
    %146 = vst.msk [vmem:[%s145] sm:$0x2] %vm142, %v141
    %v147 = vld [vmem:[#allocation0] sm:$0x3]
    %148 = vrot.lane.b32.xlu0 %v147, 110
    %v149 = vpop.permute.xlu0 %148
    %vm150 = vcmask 7168
    %s151 = scalar_lea.vmem %s1, 18
    %152 = vst.msk [vmem:[%s151] sm:$0x1] %vm150, %v149
    %s153 = scalar_lea.vmem %s1, 49
    %154 = vst.msk [vmem:[%s153] sm:$0x2] %vm150, %v149
    %v155 = vld [vmem:[#allocation0] sm:$0x3]
    %156 = vrot.lane.b32.xlu0 %v155, 109
    %v157 = vpop.permute.xlu0 %156
    %vm158 = vcmask 7168
    %s159 = scalar_lea.vmem %s1, 19
    %160 = vst.msk [vmem:[%s159] sm:$0x1] %vm158, %v157
    %s161 = scalar_lea.vmem %s1, 50
    %162 = vst.msk [vmem:[%s161] sm:$0x2] %vm158, %v157
    %v163 = vld [vmem:[#allocation0] sm:$0x3]
    %164 = vrot.lane.b32.xlu0 %v163, 108
    %v165 = vpop.permute.xlu0 %164
    %vm166 = vcmask 7168
    %s167 = scalar_lea.vmem %s1, 20
    %168 = vst.msk [vmem:[%s167] sm:$0x1] %vm166, %v165
    %s169 = scalar_lea.vmem %s1, 51
    %170 = vst.msk [vmem:[%s169] sm:$0x2] %vm166, %v165
    %v171 = vld [vmem:[#allocation0] sm:$0x3]
    %172 = vrot.lane.b32.xlu0 %v171, 107
    %v173 = vpop.permute.xlu0 %172
    %vm174 = vcmask 7168
    %s175 = scalar_lea.vmem %s1, 21
    %176 = vst.msk [vmem:[%s175] sm:$0x1] %vm174, %v173
    %s177 = scalar_lea.vmem %s1, 52
    %178 = vst.msk [vmem:[%s177] sm:$0x2] %vm174, %v173
    %v179 = vld [vmem:[#allocation0] sm:$0x3]
    %180 = vrot.lane.b32.xlu0 %v179, 106
    %v181 = vpop.permute.xlu0 %180
    %vm182 = vcmask 7168
    %s183 = scalar_lea.vmem %s1, 22
    %184 = vst.msk [vmem:[%s183] sm:$0x1] %vm182, %v181
    %s185 = scalar_lea.vmem %s1, 53
    %186 = vst.msk [vmem:[%s185] sm:$0x2] %vm182, %v181
    %v187 = vld [vmem:[#allocation0] sm:$0x3]
    %188 = vrot.lane.b32.xlu0 %v187, 105
    %v189 = vpop.permute.xlu0 %188
    %vm190 = vcmask 7168
    %s191 = scalar_lea.vmem %s1, 23
    %192 = vst.msk [vmem:[%s191] sm:$0x1] %vm190, %v189
    %s193 = scalar_lea.vmem %s1, 54
    %194 = vst.msk [vmem:[%s193] sm:$0x2] %vm190, %v189
    %v195 = vld [vmem:[#allocation0] sm:$0x3]
    %196 = vrot.lane.b32.xlu0 %v195, 104
    %v197 = vpop.permute.xlu0 %196
    %vm198 = vcmask 7168
    %s199 = scalar_lea.vmem %s1, 24
    %200 = vst.msk [vmem:[%s199] sm:$0x1] %vm198, %v197
    %s201 = scalar_lea.vmem %s1, 55
    %202 = vst.msk [vmem:[%s201] sm:$0x2] %vm198, %v197
    %v203 = vld [vmem:[#allocation0] sm:$0x3]
    %204 = vrot.lane.b32.xlu0 %v203, 103
    %v205 = vpop.permute.xlu0 %204
    %vm206 = vcmask 7168
    %s207 = scalar_lea.vmem %s1, 25
    %208 = vst.msk [vmem:[%s207] sm:$0x1] %vm206, %v205
    %s209 = scalar_lea.vmem %s1, 56
    %210 = vst.msk [vmem:[%s209] sm:$0x2] %vm206, %v205
    %v211 = vld [vmem:[#allocation0] sm:$0x3]
    %212 = vrot.lane.b32.xlu0 %v211, 102
    %v213 = vpop.permute.xlu0 %212
    %vm214 = vcmask 7168
    %s215 = scalar_lea.vmem %s1, 26
    %216 = vst.msk [vmem:[%s215] sm:$0x1] %vm214, %v213
    %s217 = scalar_lea.vmem %s1, 57
    %218 = vst.msk [vmem:[%s217] sm:$0x2] %vm214, %v213
    %v219 = vld [vmem:[#allocation0] sm:$0x3]
    %220 = vrot.lane.b32.xlu0 %v219, 101
    %v221 = vpop.permute.xlu0 %220
    %vm222 = vcmask 7168
    %s223 = scalar_lea.vmem %s1, 27
    %224 = vst.msk [vmem:[%s223] sm:$0x1] %vm222, %v221
    %s225 = scalar_lea.vmem %s1, 58
    %226 = vst.msk [vmem:[%s225] sm:$0x2] %vm222, %v221
    %v227 = vld [vmem:[#allocation0] sm:$0x3]
    %228 = vrot.lane.b32.xlu0 %v227, 100
    %v229 = vpop.permute.xlu0 %228
    %vm230 = vcmask 7168
    %s231 = scalar_lea.vmem %s1, 28
    %232 = vst.msk [vmem:[%s231] sm:$0x1] %vm230, %v229
    %s233 = scalar_lea.vmem %s1, 59
    %234 = vst.msk [vmem:[%s233] sm:$0x2] %vm230, %v229
    %v235 = vld [vmem:[#allocation0] sm:$0x3]
    %236 = vrot.lane.b32.xlu0 %v235, 99
    %v237 = vpop.permute.xlu0 %236
    %vm238 = vcmask 7168
    %s239 = scalar_lea.vmem %s1, 29
    %240 = vst.msk [vmem:[%s239] sm:$0x1] %vm238, %v237
    %s241 = scalar_lea.vmem %s1, 60
    %242 = vst.msk [vmem:[%s241] sm:$0x2] %vm238, %v237
    %v243 = vld [vmem:[#allocation0] sm:$0x3]
    %244 = vrot.lane.b32.xlu0 %v243, 98
    %v245 = vpop.permute.xlu0 %244
    %vm246 = vcmask 7168
    %s247 = scalar_lea.vmem %s1, 30
    %248 = vst.msk [vmem:[%s247] sm:$0x1] %vm246, %v245
    %s249 = scalar_lea.vmem %s1, 61
    %250 = vst.msk [vmem:[%s249] sm:$0x2] %vm246, %v245
    %v251 = vld [vmem:[#allocation0] sm:$0x3]
    %252 = vrot.lane.b32.xlu0 %v251, 97
    %v253 = vpop.permute.xlu0 %252
    %vm254 = vcmask 7168
    %s255 = scalar_lea.vmem %s1, 31
    %256 = vst.msk [vmem:[%s255] sm:$0x1] %vm254, %v253
    %s257 = scalar_lea.vmem %s1, 62
    %258 = vst.msk [vmem:[%s257] sm:$0x2] %vm254, %v253

// kernel: conv_mlp_pallas.1
$region0: #{conv_mlp_pallas.1}
  #allocation0 [shape = 'u32[]', space=smem, size = 0x4, offset = 0x4, fixed_abs, tag = 'smem constant byte address 0x4 - core index']
  #allocation1 [shape = 'u32[144,128]{1,0:T(1,128)}', space=vmem, size = 0x12000, scoped, tag = 'internal scratch']
  %s0 = inlined_call_operand.vmem [shape: f32[8,256], index: 0, kind: input, shape index: {}]
  %s1 = inlined_call_operand.vmem [shape: f32[64,8], index: 1, kind: input, shape index: {}]
  %s2 = inlined_call_operand.vmem [shape: f32[64,1], index: 2, kind: input, shape index: {}]
  %s3 = inlined_call_operand.vmem [shape: f32[8,64], index: 3, kind: input, shape index: {}]
  %s4 = inlined_call_operand.vmem [shape: f32[8,1], index: 4, kind: input, shape index: {}]
  %s5 = inlined_call_operand.vmem [shape: f32[8,256], index: 5, kind: output, shape index: {}]
  %s6 = sld [smem:[#allocation0]]
  $region30: #{conv_mlp_pallas.1} parent=0
    _
  %s8 = ssub.s32 1, %s6
  %s9 = scalar_select 0, %s8, %s6
  // Predicated region
  $region2: #{conv_mlp_pallas.1} parent=0 // pred_check
    _
  $region3: #{conv_mlp_pallas.1} parent=0 // pred_check_branch
    %11 = sbr.rel (0) target = $region5
  $region4: #{conv_mlp_pallas.1} parent=0 // pred_region
    _
  $region5: #{conv_mlp_pallas.1} parent=0 // pred_fallthru
    _
  // Predicated region
  $region6: #{conv_mlp_pallas.1} parent=0 // pred_check
    _
  $region7: #{conv_mlp_pallas.1} parent=0 // pred_check_branch
    %13 = sbr.rel (0) target = $region9
  $region8: #{conv_mlp_pallas.1} parent=0 // pred_region
    _
  $region9: #{conv_mlp_pallas.1} parent=0 // pred_fallthru
    _
  // Predicated region
  $region10: #{conv_mlp_pallas.1} parent=0 // pred_check
    _
  $region11: #{conv_mlp_pallas.1} parent=0 // pred_check_branch
    %15 = sbr.rel (0) target = $region13
  $region12: #{conv_mlp_pallas.1} parent=0 // pred_region
    _
  $region13: #{conv_mlp_pallas.1} parent=0 // pred_fallthru
    _
  // Predicated region
  $region14: #{conv_mlp_pallas.1} parent=0 // pred_check
    _
  $region15: #{conv_mlp_pallas.1} parent=0 // pred_check_branch
    %17 = sbr.rel (0) target = $region17
  $region16: #{conv_mlp_pallas.1} parent=0 // pred_region
    _
  $region17: #{conv_mlp_pallas.1} parent=0 // pred_fallthru
    _
  // Predicated region
  $region18: #{conv_mlp_pallas.1} parent=0 // pred_check
    _
  $region19: #{conv_mlp_pallas.1} parent=0 // pred_check_branch
    %19 = sbr.rel (0) target = $region21
  $region20: #{conv_mlp_pallas.1} parent=0 // pred_region
    _
  $region21: #{conv_mlp_pallas.1} parent=0 // pred_fallthru
    _
  %v20 = vld [vmem:[%s1] sm:$0xff]
  %v21 = vld [vmem:[%s1 + $0x8] sm:$0xff]
  %v22 = vld [vmem:[%s1 + $0x10] sm:$0xff]
  %v23 = vld [vmem:[%s1 + $0x18] sm:$0xff]
  %v24 = vld [vmem:[%s1 + $0x20] sm:$0xff]
  %v25 = vld [vmem:[%s1 + $0x28] sm:$0xff]
  %v26 = vld [vmem:[%s1 + $0x30] sm:$0xff]
  %v27 = vld [vmem:[%s1 + $0x38] sm:$0xff]
  %v28 = vld [vmem:[%s0] sm:$0xff]
  %v29 = vld [vmem:[%s0 + $0x8] sm:$0xff]
  %v30 = vld [vmem:[%s2] sm:$0xff]
  %v31 = vld [vmem:[%s2 + $0x8] sm:$0xff]
  %v32 = vld [vmem:[%s2 + $0x10] sm:$0xff]
  %v33 = vld [vmem:[%s2 + $0x18] sm:$0xff]
  %v34 = vld [vmem:[%s2 + $0x20] sm:$0xff]
  %v35 = vld [vmem:[%s2 + $0x28] sm:$0xff]
  %v36 = vld [vmem:[%s2 + $0x30] sm:$0xff]
  %v37 = vld [vmem:[%s2 + $0x38] sm:$0xff]
  %39 = vset.pattern.permute.xlu0 0
  %40 = vperm.xlu0 %39, %v30
  %v41 = vpop.permute.xlu0 %40
  %44 = vset.pattern.permute.xlu0 0
  %45 = vperm.xlu0 %44, %v31
  %v46 = vpop.permute.xlu0 %45
  %49 = vset.pattern.permute.xlu0 0
  %50 = vperm.xlu0 %49, %v32
  %v51 = vpop.permute.xlu0 %50
  %54 = vset.pattern.permute.xlu0 0
  %55 = vperm.xlu0 %54, %v33
  %v56 = vpop.permute.xlu0 %55
  %59 = vset.pattern.permute.xlu0 0
  %60 = vperm.xlu0 %59, %v34
  %v61 = vpop.permute.xlu0 %60
  %64 = vset.pattern.permute.xlu0 0
  %65 = vperm.xlu0 %64, %v35
  %v66 = vpop.permute.xlu0 %65
  %69 = vset.pattern.permute.xlu0 0
  %70 = vperm.xlu0 %69, %v36
  %v71 = vpop.permute.xlu0 %70
  %74 = vset.pattern.permute.xlu0 0
  %75 = vperm.xlu0 %74, %v37
  %v76 = vpop.permute.xlu0 %75
  %vm78 = vcmask 64512
  %v80 = vsel %vm78, %v20, 0
  %v83 = vsel %vm78, %v21, 0
  %v86 = vsel %vm78, %v22, 0
  %v89 = vsel %vm78, %v23, 0
  %v92 = vsel %vm78, %v24, 0
  %v95 = vsel %vm78, %v25, 0
  %v98 = vsel %vm78, %v26, 0
  %v101 = vsel %vm78, %v27, 0
  %103 = vmatprep.subr.mxu0 %v29
  %104 = vmatpush1.msra.mxu0 %v28
  %105 = vmatprep.subr.mxu0 0.0
  %106 = vmatpush1.msra.mxu0 0.0
  %107 = vmatprep.subr.mxu0 0.0
  %108 = vmatpush1.msra.mxu0 0.0
  %109 = vmatprep.subr.mxu0 0.0
  %110 = vmatpush1.msra.mxu0 0.0
  %111 = vmatprep.subr.mxu0 0.0
  %112 = vmatpush1.msra.mxu0 0.0
  %113 = vmatprep.subr.mxu0 0.0
  %114 = vmatpush1.msra.mxu0 0.0
  %115 = vmatprep.subr.mxu0 0.0
  %116 = vmatpush1.msra.mxu0 0.0
  %117 = vmatprep.subr.mxu0 0.0
  %118 = vmatpush1.msra.mxu0 0.0
  %119 = vmatprep.subr.mxu0 0.0
  %120 = vmatpush1.msra.mxu0 0.0
  %121 = vmatprep.subr.mxu0 0.0
  %122 = vmatpush1.msra.mxu0 0.0
  %123 = vmatprep.subr.mxu0 0.0
  %124 = vmatpush1.msra.mxu0 0.0
  %125 = vmatprep.subr.mxu0 0.0
  %126 = vmatpush1.msra.mxu0 0.0
  %127 = vmatprep.subr.mxu0 0.0
  %128 = vmatpush1.msra.mxu0 0.0
  %129 = vmatprep.subr.mxu0 0.0
  %130 = vmatpush1.msra.mxu0 0.0
  %131 = vmatprep.subr.mxu0 0.0
  %132 = vmatpush1.msra.mxu0 0.0
  %133 = vmatprep.subr.mxu0 0.0
  %134 = vmatpush1.msra.mxu0 0.0
  %135 = vmatprep.subr.mxu0 0.0
  %136 = vmatpush1.msra.mxu0 0.0
  %137 = vmatprep.subr.mxu0 0.0
  %138 = vmatpush1.msra.mxu0 0.0
  %139 = vmatprep.subr.mxu0 0.0
  %140 = vmatpush1.msra.mxu0 0.0
  %141 = vmatprep.subr.mxu0 0.0
  %142 = vmatpush1.msra.mxu0 0.0
  %143 = vmatprep.subr.mxu0 0.0
  %144 = vmatpush1.msra.mxu0 0.0
  %145 = vmatprep.subr.mxu0 0.0
  %146 = vmatpush1.msra.mxu0 0.0
  %147 = vmatprep.subr.mxu0 0.0
  %148 = vmatpush1.msra.mxu0 0.0
  %149 = vmatprep.subr.mxu0 0.0
  %150 = vmatpush1.msra.mxu0 0.0
  %151 = vmatprep.subr.mxu0 0.0
  %152 = vmatpush1.msra.mxu0 0.0
  %153 = vmatprep.subr.mxu0 0.0
  %154 = vmatpush1.msra.mxu0 0.0
  %155 = vmatprep.subr.mxu0 0.0
  %156 = vmatpush1.msra.mxu0 0.0
  %157 = vmatprep.subr.mxu0 0.0
  %158 = vmatpush1.msra.mxu0 0.0
  %159 = vmatprep.subr.mxu0 0.0
  %160 = vmatpush1.msra.mxu0 0.0
  %161 = vmatprep.subr.mxu0 0.0
  %162 = vmatpush1.msra.mxu0 0.0
  %163 = vmatprep.subr.mxu0 0.0
  %164 = vmatpush1.msra.mxu0 0.0
  %165 = vmatprep.subr.mxu0 0.0
  %166 = vmatpush1.msra.mxu0 0.0
  %167 = vmatprep.mubr.f32.mxu0 0.0
  %168 = vmatmul.mubr.f32.gmra.mrb[0].mxu0 %v80
  %v169 = vpop.f32.mrb[0].mxu0
  %v170 = vadd.f32 %v41, %v169
  %v171 = vpop.f32.mrb[0].mxu0
  %v172 = vadd.f32 %v41, %v171
  %173 = vmatprep.mubr.f32.mxu0 0.0
  %174 = vmatmul.mubr.f32.gmra.mrb[0].mxu0 %v83
  %v175 = vpop.f32.mrb[0].mxu0
  %v176 = vadd.f32 %v46, %v175
  %v177 = vpop.f32.mrb[0].mxu0
  %v178 = vadd.f32 %v46, %v177
  %179 = vmatprep.mubr.f32.mxu0 0.0
  %180 = vmatmul.mubr.f32.gmra.mrb[0].mxu0 %v86
  %v181 = vpop.f32.mrb[0].mxu0
  %v182 = vadd.f32 %v51, %v181
  %v183 = vpop.f32.mrb[0].mxu0
  %v184 = vadd.f32 %v51, %v183
  %185 = vmatprep.mubr.f32.mxu0 0.0
  %186 = vmatmul.mubr.f32.gmra.mrb[0].mxu0 %v89
  %v187 = vpop.f32.mrb[0].mxu0
  %v188 = vadd.f32 %v56, %v187
  %v189 = vpop.f32.mrb[0].mxu0
  %v190 = vadd.f32 %v56, %v189
  %191 = vmatprep.mubr.f32.mxu0 0.0
  %192 = vmatmul.mubr.f32.gmra.mrb[0].mxu0 %v92
  %v193 = vpop.f32.mrb[0].mxu0
  %v194 = vadd.f32 %v61, %v193
  %v195 = vpop.f32.mrb[0].mxu0
  %v196 = vadd.f32 %v61, %v195
  %197 = vmatprep.mubr.f32.mxu0 0.0
  %198 = vmatmul.mubr.f32.gmra.mrb[0].mxu0 %v95
  %v199 = vpop.f32.mrb[0].mxu0
  %v200 = vadd.f32 %v66, %v199
  %v201 = vpop.f32.mrb[0].mxu0
  %v202 = vadd.f32 %v66, %v201
  %203 = vmatprep.mubr.f32.mxu0 0.0
  %204 = vmatmul.mubr.f32.gmra.mrb[0].mxu0 %v98
  %v205 = vpop.f32.mrb[0].mxu0
  %v206 = vadd.f32 %v71, %v205
  %v207 = vpop.f32.mrb[0].mxu0
  %v208 = vadd.f32 %v71, %v207
  %209 = vmatprep.mubr.f32.mxu0 0.0
  %210 = vmatmul.mubr.f32.gmra.mrb[0].mxu0 %v101
  %v211 = vpop.f32.mrb[0].mxu0
  %v212 = vadd.f32 %v76, %v211
  %v213 = vpop.f32.mrb[0].mxu0
  %v214 = vadd.f32 %v76, %v213
  %215 = vdwg.mxu0
  %v216 = vmax.f32 %v170, 0.0
  %v217 = vmax.f32 %v172, 0.0
  %v218 = vmax.f32 %v176, 0.0
  %v219 = vmax.f32 %v178, 0.0
  %v220 = vmax.f32 %v182, 0.0
  %v221 = vmax.f32 %v184, 0.0
  %v222 = vmax.f32 %v188, 0.0
  %v223 = vmax.f32 %v190, 0.0
  %v224 = vmax.f32 %v194, 0.0
  %v225 = vmax.f32 %v196, 0.0
  %v226 = vmax.f32 %v200, 0.0
  %v227 = vmax.f32 %v202, 0.0
  %v228 = vmax.f32 %v206, 0.0
  %v229 = vmax.f32 %v208, 0.0
  %v230 = vmax.f32 %v212, 0.0
  %v231 = vmax.f32 %v214, 0.0
  %v232 = vld [vmem:[%s3] sm:$0xff]
  %v233 = vld [vmem:[%s4] sm:$0xff]
  %235 = vset.pattern.permute.xlu0 0
  %236 = vperm.xlu0 %235, %v233
  %v237 = vpop.permute.xlu0 %236
  %vm239 = vcmask 523264
  %v241 = vsel %vm239, %v232, 0
  %243 = vmatprep.subr.mxu0 %v217
  %244 = vmatpush1.msra.mxu0 %v216
  %245 = vmatprep.subr.mxu0 %v219
  %246 = vmatpush1.msra.mxu0 %v218
  %247 = vmatprep.subr.mxu0 %v221
  %248 = vmatpush1.msra.mxu0 %v220
  %249 = vmatprep.subr.mxu0 %v223
  %250 = vmatpush1.msra.mxu0 %v222
  %251 = vmatprep.subr.mxu0 %v225
  %252 = vmatpush1.msra.mxu0 %v224
  %253 = vmatprep.subr.mxu0 %v227
  %254 = vmatpush1.msra.mxu0 %v226
  %255 = vmatprep.subr.mxu0 %v229
  %256 = vmatpush1.msra.mxu0 %v228
  %257 = vmatprep.subr.mxu0 %v231
  %258 = vmatpush1.msra.mxu0 %v230
  %259 = vmatprep.subr.mxu0 0.0
  %260 = vmatpush1.msra.mxu0 0.0
  %261 = vmatprep.subr.mxu0 0.0
  %262 = vmatpush1.msra.mxu0 0.0
  %263 = vmatprep.subr.mxu0 0.0
  %264 = vmatpush1.msra.mxu0 0.0
  %265 = vmatprep.subr.mxu0 0.0
  %266 = vmatpush1.msra.mxu0 0.0
  %267 = vmatprep.subr.mxu0 0.0
  %268 = vmatpush1.msra.mxu0 0.0
  %269 = vmatprep.subr.mxu0 0.0
  %270 = vmatpush1.msra.mxu0 0.0
  %271 = vmatprep.subr.mxu0 0.0
  %272 = vmatpush1.msra.mxu0 0.0
  %273 = vmatprep.subr.mxu0 0.0
  %274 = vmatpush1.msra.mxu0 0.0
  %275 = vmatprep.subr.mxu0 0.0
  %276 = vmatpush1.msra.mxu0 0.0
  %277 = vmatprep.subr.mxu0 0.0
  %278 = vmatpush1.msra.mxu0 0.0
  %279 = vmatprep.subr.mxu0 0.0
  %280 = vmatpush1.msra.mxu0 0.0
  %281 = vmatprep.subr.mxu0 0.0
  %282 = vmatpush1.msra.mxu0 0.0
  %283 = vmatprep.subr.mxu0 0.0
  %284 = vmatpush1.msra.mxu0 0.0
  %285 = vmatprep.subr.mxu0 0.0
  %286 = vmatpush1.msra.mxu0 0.0
  %287 = vmatprep.subr.mxu0 0.0
  %288 = vmatpush1.msra.mxu0 0.0
  %289 = vmatprep.subr.mxu0 0.0
  %290 = vmatpush1.msra.mxu0 0.0
  %291 = vmatprep.subr.mxu0 0.0
  %292 = vmatpush1.msra.mxu0 0.0
  %293 = vmatprep.subr.mxu0 0.0
  %294 = vmatpush1.msra.mxu0 0.0
  %295 = vmatprep.subr.mxu0 0.0
  %296 = vmatpush1.msra.mxu0 0.0
  %297 = vmatprep.subr.mxu0 0.0
  %298 = vmatpush1.msra.mxu0 0.0
  %299 = vmatprep.subr.mxu0 0.0
  %300 = vmatpush1.msra.mxu0 0.0
  %301 = vmatprep.subr.mxu0 0.0
  %302 = vmatpush1.msra.mxu0 0.0
  %303 = vmatprep.subr.mxu0 0.0
  %304 = vmatpush1.msra.mxu0 0.0
  %305 = vmatprep.subr.mxu0 0.0
  %306 = vmatpush1.msra.mxu0 0.0
  %307 = vmatprep.mubr.f32.mxu0 0.0
  %308 = vmatmul.mubr.f32.gmra.mrb[0].mxu0 %v241
  %v309 = vpop.f32.mrb[0].mxu0
  %v310 = vadd.f32 %v237, %v309
  %v311 = vpop.f32.mrb[0].mxu0
  %v312 = vadd.f32 %v237, %v311
  %313 = vdwg.mxu0
  %314 = vst [vmem:[%s5] sm:$0xff] %v310
  %315 = vst [vmem:[%s5 + $0x8] sm:$0xff] %v312
  // Predicated region
  $region22: #{conv_mlp_pallas.1} parent=0 // pred_check
    _
  $region23: #{conv_mlp_pallas.1} parent=0 // pred_check_branch
    %317 = sbr.rel (0) target = $region25
  $region24: #{conv_mlp_pallas.1} parent=0 // pred_region
    _
  $region25: #{conv_mlp_pallas.1} parent=0 // pred_fallthru
    _
  // Predicated region
  $region26: #{conv_mlp_pallas.1} parent=0 // pred_check
    _
  $region27: #{conv_mlp_pallas.1} parent=0 // pred_check_branch
    %319 = sbr.rel (0) target = $region29
  $region28: #{conv_mlp_pallas.1} parent=0 // pred_region
    _
  $region29: #{conv_mlp_pallas.1} parent=0 // pred_fallthru
    _

</llo_original>
